<compile_context>
chip_gen: v7x
topology: tpu7x:2x2x1
jax: 0.10.0
libtpu: 0.0.40
codegen_flags: <defaults>
</compile_context>

<pallas_src>
import jax
import jax.numpy as jnp
from jax.experimental import pallas as pl
from jax.experimental.pallas import tpu as pltpu


def _round_up(n, m):
    return ((n + m - 1) // m) * m


def _mlp_kernel(x_ref, w1t_ref, b1_ref, w2_ref, b2_ref, o_ref):
    # Layer 1 on the MXU, NT matmul (contract last dims, like q @ k^T):
    #   hT[j, b] = sum_d w1t[j, d] * x[b, d]        -> (H, TB), lane-dense.
    hT = jax.lax.dot_general(
        w1t_ref[...], x_ref[...],
        dimension_numbers=(((1,), (1,)), ((), ())),
        preferred_element_type=jnp.float32)
    hT = jnp.maximum(hT + b1_ref[...], 0.0)              # bias + ReLU (VPU)
    # Layer 2: weighted reduction over the 32 hidden units (sublane axis):
    # dense VPU multiplies + a handful of adds / XLU sublane reduces -> (1, TB).
    z = jnp.sum(hT * w2_ref[...], axis=0, keepdims=True) + b2_ref[...]
    # Sigmoid via a single EUP transcendental (exact, no overflow corner case).
    o_ref[...] = 0.5 * jnp.tanh(0.5 * z) + 0.5


def emotion_regressor(x, w1, b1, w2, b2, *, block_batch=16384):
    """x: (B, D) f32; returns (B, 1) f32 = sigmoid(relu(x @ w1 + b1) @ w2 + b2).

    Parameters are stored "input-major": w1 (D, H), b1 (1, H), w2 (H, 1),
    b2 (1, 1) -- i.e. the transpose of PyTorch's Linear.weight layout.
    """
    B, D = x.shape
    H = w1.shape[1]
    assert w1.shape == (D, H) and b1.shape == (1, H)
    assert w2.shape == (H, 1) and b2.shape == (1, 1)

    # ---- batch tiling --------------------------------------------------
    block_batch = max(128, _round_up(block_batch, 128))
    B8 = _round_up(max(B, 8), 8)
    small_cutoff = min(block_batch, 1024)
    if B8 <= small_cutoff:
        # Single tile: the (1, TB) output block equals the full output dims,
        # so TB only has to be a sublane (8) multiple.
        TB = B8
    else:
        # >= 2 lane-aligned tiles: multiple of 128 keeps the (1, TB) output
        # block lane-dense; >= 2 steps gives megacore / pipelining work.
        n_tiles = max(pl.cdiv(B8, block_batch), 2)
        TB = _round_up(pl.cdiv(B8, n_tiles), 128)
    B_pad = _round_up(B8, TB)
    grid = (B_pad // TB,)

    # Pad only when needed; the tile choice keeps the pad to < TB rows and
    # to zero for batch sizes that tile evenly.
    # TODO(synk): for awkward B this still materializes one copy of x; a
    # ragged last block with in-kernel masking would avoid it entirely.
    x_p = x if B_pad == B else jnp.pad(x, ((0, B_pad - B), (0, 0)))

    # Feature-major parameter views (tiny; computed once outside the kernel).
    w1t = w1.T                     # (H, D)
    b1c = b1.T                     # (H, 1)

    # Advisory cost hint for XLA scheduling around the custom call.
    flops = 2 * B_pad * D * H + B_pad * (3 * H + 4)
    bytes_accessed = 4 * (B_pad * D + B_pad + D * H + 2 * H + 1)
    cost = pl.CostEstimate(flops=flops, transcendentals=B_pad,
                           bytes_accessed=bytes_accessed)

    out = pl.pallas_call(
        _mlp_kernel,
        out_shape=jax.ShapeDtypeStruct((1, B_pad), jnp.float32),
        grid=grid,
        in_specs=[
            pl.BlockSpec((TB, D), lambda i: (i, 0)),   # x: streamed over batch
            pl.BlockSpec((H, D), lambda i: (0, 0)),    # w1^T: VMEM-resident
            pl.BlockSpec((H, 1), lambda i: (0, 0)),    # b1:   VMEM-resident
            pl.BlockSpec((H, 1), lambda i: (0, 0)),    # w2:   VMEM-resident
            pl.BlockSpec((1, 1), lambda i: (0, 0)),    # b2:   VMEM-resident
        ],
        out_specs=pl.BlockSpec((1, TB), lambda i: (0, i)),   # lane-dense store
        compiler_params=pltpu.CompilerParams(
            # Batch axis is embarrassingly parallel -> megacore sharding (v7x).
            dimension_semantics=("parallel",),
            # Room for 2 x 4 MiB x buffers + dense intermediates; stays under
            # v7x's 64 MiB per-TC VMEM while lifting v5e/v6e defaults.
            vmem_limit_bytes=48 << 20,
        ),
        cost_estimate=cost,
    )(x_p, w1t, b1c, w2, b2)

    return out[0, :B].reshape(B, 1)


def init_params(key, input_dim=64, hidden=32):
    """Deterministic synthetic parameters (shapes match the PyTorch module)."""
    k1, k2, k3, k4 = jax.random.split(key, 4)
    lim1 = 1.0 / jnp.sqrt(input_dim)
    lim2 = 1.0 / jnp.sqrt(hidden)
    w1 = jax.random.uniform(k1, (input_dim, hidden), jnp.float32, -lim1, lim1)
    b1 = jax.random.uniform(k2, (1, hidden), jnp.float32, -lim1, lim1)
    w2 = jax.random.uniform(k3, (hidden, 1), jnp.float32, -lim2, lim2)
    b2 = jax.random.uniform(k4, (1, 1), jnp.float32, -lim2, lim2)
    return w1, b1, w2, b2


def _ref(x, w1, b1, w2, b2):
    return jax.nn.sigmoid(jnp.maximum(x @ w1 + b1, 0.0) @ w2 + b2)


if __name__ == "__main__":
    key = jax.random.PRNGKey(0)
    kx, kp, kx2 = jax.random.split(key, 3)

    batch, input_dim, hidden = 8, 64, 32
    x = jax.random.normal(kx, (batch, input_dim), dtype=jnp.float32)
    w1, b1, w2, b2 = init_params(kp, input_dim, hidden)

    # Single-tile case.
    out = jax.block_until_ready(emotion_regressor(x, w1, b1, w2, b2))
    ref = _ref(x, w1, b1, w2, b2)
    assert out.shape == (batch, 1)
    assert jnp.allclose(out, ref, atol=1e-4, rtol=1e-4), \
        float(jnp.max(jnp.abs(out - ref)))

    # Multi-tile + ragged-batch case: B=300 with a 128-row tile cap
    # -> lane-aligned TB=128, grid=(3,), padded tail sliced off.
    x2 = jax.random.normal(kx2, (300, input_dim), dtype=jnp.float32)
    out2 = jax.block_until_ready(
        emotion_regressor(x2, w1, b1, w2, b2, block_batch=128))
    ref2 = _ref(x2, w1, b1, w2, b2)
    assert out2.shape == (300, 1)
    assert jnp.allclose(out2, ref2, atol=1e-4, rtol=1e-4), \
        float(jnp.max(jnp.abs(out2 - ref2)))

    print("KERNEL_OK")
</pallas_src>

<mosaic_0001>
module attributes {stable_mosaic.version = 11 : i64} {
  func.func @_mlp_kernel(%arg0: i32, %arg1: memref<8x64xf32, #tpu.memory_space<vmem>>, %arg2: memref<32x64xf32, #tpu.memory_space<vmem>>, %arg3: memref<32x1xf32, #tpu.memory_space<vmem>>, %arg4: memref<32x1xf32, #tpu.memory_space<vmem>>, %arg5: memref<1x1xf32, #tpu.memory_space<vmem>>, %arg6: memref<1x8xf32, #tpu.memory_space<vmem>>) attributes {dimension_semantics = [#tpu.dimension_semantics<parallel>], iteration_bounds = array<i64: 1>, scalar_prefetch = 0 : i64, scratch_operands = 0 : i64, tpu.core_type = #tpu.core_type<tc>, window_params = [{transform_indices = @transform_0, window_bounds = array<i64: 8, 64>}, {pipeline_mode = #tpu.pipeline_mode<synchronous>, transform_indices = @transform_1, window_bounds = array<i64: 32, 64>}, {pipeline_mode = #tpu.pipeline_mode<synchronous>, transform_indices = @transform_2, window_bounds = array<i64: 32, 1>}, {pipeline_mode = #tpu.pipeline_mode<synchronous>, transform_indices = @transform_3, window_bounds = array<i64: 32, 1>}, {pipeline_mode = #tpu.pipeline_mode<synchronous>, transform_indices = @transform_4, window_bounds = array<i64: 1, 1>}, {transform_indices = @transform_5, window_bounds = array<i64: 1, 8>}]} {
    %c0 = arith.constant 0 : index
    %c0_0 = arith.constant 0 : index
    %0 = vector.load %arg2[%c0, %c0_0] : memref<32x64xf32, #tpu.memory_space<vmem>>, vector<32x64xf32>
    %c0_1 = arith.constant 0 : index
    %c0_2 = arith.constant 0 : index
    %1 = vector.load %arg1[%c0_1, %c0_2] : memref<8x64xf32, #tpu.memory_space<vmem>>, vector<8x64xf32>
    %cst = arith.constant dense<0.000000e+00> : vector<32x8xf32>
    %2 = tpu.matmul %0, %1, %cst {dimension_numbers = #tpu.dot_dimension_numbers<[1], [1], [0], [0], [0, 0, 1, 0], [], []>} : vector<32x64xf32>, vector<8x64xf32>, vector<32x8xf32> -> vector<32x8xf32>
    %c0_3 = arith.constant 0 : index
    %c0_4 = arith.constant 0 : index
    %3 = vector.load %arg3[%c0_3, %c0_4] : memref<32x1xf32, #tpu.memory_space<vmem>>, vector<32x1xf32>
    %4 = vector.broadcast %3 : vector<32x1xf32> to vector<32x8xf32>
    %5 = arith.addf %2, %4 : vector<32x8xf32>
    %cst_5 = arith.constant 0.000000e+00 : f32
    %6 = vector.broadcast %cst_5 : f32 to vector<32x8xf32>
    %7 = arith.maximumf %5, %6 : vector<32x8xf32>
    %c0_6 = arith.constant 0 : index
    %c0_7 = arith.constant 0 : index
    %8 = vector.load %arg4[%c0_6, %c0_7] : memref<32x1xf32, #tpu.memory_space<vmem>>, vector<32x1xf32>
    %9 = vector.broadcast %8 : vector<32x1xf32> to vector<32x8xf32>
    %10 = arith.mulf %7, %9 : vector<32x8xf32>
    %cst_8 = arith.constant dense<0.000000e+00> : vector<8xf32>
    %11 = vector.multi_reduction <add>, %10, %cst_8 [0] : vector<32x8xf32> to vector<8xf32>
    %12 = vector.shape_cast %11 : vector<8xf32> to vector<1x8xf32>
    %c0_9 = arith.constant 0 : index
    %c0_10 = arith.constant 0 : index
    %13 = vector.load %arg5[%c0_9, %c0_10] : memref<1x1xf32, #tpu.memory_space<vmem>>, vector<1x1xf32>
    %14 = vector.broadcast %13 : vector<1x1xf32> to vector<1x8xf32>
    %15 = arith.addf %12, %14 : vector<1x8xf32>
    %cst_11 = arith.constant 5.000000e-01 : f32
    %16 = vector.broadcast %cst_11 : f32 to vector<1x8xf32>
    %17 = arith.mulf %16, %15 : vector<1x8xf32>
    %18 = math.tanh %17 : vector<1x8xf32>
    %cst_12 = arith.constant 5.000000e-01 : f32
    %19 = vector.broadcast %cst_12 : f32 to vector<1x8xf32>
    %20 = arith.mulf %19, %18 : vector<1x8xf32>
    %cst_13 = arith.constant 5.000000e-01 : f32
    %21 = vector.broadcast %cst_13 : f32 to vector<1x8xf32>
    %22 = arith.addf %20, %21 : vector<1x8xf32>
    %c0_14 = arith.constant 0 : index
    %c0_15 = arith.constant 0 : index
    %23 = vector.load %arg6[%c0_14, %c0_15] : memref<1x8xf32, #tpu.memory_space<vmem>>, vector<1x8xf32>
    tpu.vector_store %arg6[%c0_14, %c0_15], %22 {strides = array<i32>} : memref<1x8xf32, #tpu.memory_space<vmem>>, vector<1x8xf32>,
    return
  }
  func.func @transform_0(%arg0: i32) -> (i32, i32) {
    %c0_i32 = arith.constant 0 : i32
    %c0_i32_0 = arith.constant 0 : i32
    return %arg0, %c0_i32 : i32, i32
  }
  func.func @transform_1(%arg0: i32) -> (i32, i32) {
    %c0_i32 = arith.constant 0 : i32
    %c0_i32_0 = arith.constant 0 : i32
    %c0_i32_1 = arith.constant 0 : i32
    return %c0_i32, %c0_i32_0 : i32, i32
  }
  func.func @transform_2(%arg0: i32) -> (i32, i32) {
    %c0_i32 = arith.constant 0 : i32
    %c0_i32_0 = arith.constant 0 : i32
    %c0_i32_1 = arith.constant 0 : i32
    return %c0_i32, %c0_i32_0 : i32, i32
  }
  func.func @transform_3(%arg0: i32) -> (i32, i32) {
    %c0_i32 = arith.constant 0 : i32
    %c0_i32_0 = arith.constant 0 : i32
    %c0_i32_1 = arith.constant 0 : i32
    return %c0_i32, %c0_i32_0 : i32, i32
  }
  func.func @transform_4(%arg0: i32) -> (i32, i32) {
    %c0_i32 = arith.constant 0 : i32
    %c0_i32_0 = arith.constant 0 : i32
    %c0_i32_1 = arith.constant 0 : i32
    return %c0_i32, %c0_i32_0 : i32, i32
  }
  func.func @transform_5(%arg0: i32) -> (i32, i32) {
    %c0_i32 = arith.constant 0 : i32
    %c0_i32_0 = arith.constant 0 : i32
    return %c0_i32, %arg0 : i32, i32
  }
}

</mosaic_0001>

<llo_original>
// kernel: tpu_custom_call.1
$region0: #{tpu_custom_call.1}
  #allocation0 [shape = 'u32[]', space=smem, size = 0x4, offset = 0x4, fixed_abs, tag = 'smem constant byte address 0x4 - core index']
  #allocation1 [shape = 'u32[144,128]{1,0:T(1,128)}', space=vmem, size = 0x12000, scoped, tag = 'internal scratch']
  #allocation2 [shape = 'f32[1,1]{1,0:T(1,128)S(1)}', space=vmem, size = 0x200, scoped, tag = 'scoped memory for tpu_custom_call.1']
  %s0 = inlined_call_operand.vmem [shape: f32[8,64], index: 0, kind: input, shape index: {}]
  %s1 = inlined_call_operand.vmem [shape: f32[32,64], index: 1, kind: input, shape index: {}]
  %s2 = inlined_call_operand.vmem [shape: f32[32,1], index: 2, kind: input, shape index: {}]
  %s3 = inlined_call_operand.vmem [shape: f32[32,1], index: 3, kind: input, shape index: {}]
  %s4 = inlined_call_operand.<no memory space> [shape: f32[1,1], index: 4, kind: input, shape index: {}]
  %s5 = inlined_call_operand.hbm [shape: f32[1,8], index: 5, kind: output, shape index: {}]
  %s6 = sld [smem:[#allocation0]]
  $region30: #{tpu_custom_call.1} parent=0
    _
  %s8 = ssub.s32 1, %s6
  %s9 = scalar_select 0, %s8, %s6
  %v10 = vstv %s4
  %11 = vst [vmem:[#allocation2] sm:$0x1] %v10
  $region1: #{tpu_custom_call.1} parent=0
    #allocation3 [shape = 'u8[512]{0}', space=vmem, size = 0x400, scoped, tag = 'output window, operand 0, single buffered']
    #allocation4 [shape = 's32[1]{0}', space=sflag, size = 0x4, scoped, tag = 'scoped memory for tpu_custom_call.1']
    %12 = vsyncpa [#allocation4], 0
    // Predicated region
    $region2: #{tpu_custom_call.1} parent=1 // pred_check
      _
    $region3: #{tpu_custom_call.1} parent=1 // pred_check_branch
      %14 = sbr.rel (0) target = $region5
    $region4: #{tpu_custom_call.1} parent=1 // pred_region
      _
    $region5: #{tpu_custom_call.1} parent=1 // pred_fallthru
      _
    // Predicated region
    $region6: #{tpu_custom_call.1} parent=1 // pred_check
      _
    $region7: #{tpu_custom_call.1} parent=1 // pred_check_branch
      %16 = sbr.rel (0) target = $region9
    $region8: #{tpu_custom_call.1} parent=1 // pred_region
      _
    $region9: #{tpu_custom_call.1} parent=1 // pred_fallthru
      _
    // Predicated region
    $region10: #{tpu_custom_call.1} parent=1 // pred_check
      _
    $region11: #{tpu_custom_call.1} parent=1 // pred_check_branch
      %18 = sbr.rel (0) target = $region13
    $region12: #{tpu_custom_call.1} parent=1 // pred_region
      _
    $region13: #{tpu_custom_call.1} parent=1 // pred_fallthru
      _
    // Predicated region
    $region14: #{tpu_custom_call.1} parent=1 // pred_check
      _
    $region15: #{tpu_custom_call.1} parent=1 // pred_check_branch
      %20 = sbr.rel (0) target = $region17
    $region16: #{tpu_custom_call.1} parent=1 // pred_region
      _
    $region17: #{tpu_custom_call.1} parent=1 // pred_fallthru
      _
    // Predicated region
    $region18: #{tpu_custom_call.1} parent=1 // pred_check
      _
    $region19: #{tpu_custom_call.1} parent=1 // pred_check_branch
      %22 = sbr.rel (0) target = $region21
    $region20: #{tpu_custom_call.1} parent=1 // pred_region
      _
    $region21: #{tpu_custom_call.1} parent=1 // pred_fallthru
      _
    %v23 = vld [vmem:[%s1] sm:$0xff]
    %v24 = vld [vmem:[%s1 + $0x8] sm:$0xff]
    %v25 = vld [vmem:[%s1 + $0x10] sm:$0xff]
    %v26 = vld [vmem:[%s1 + $0x18] sm:$0xff]
    %v27 = vld [vmem:[%s0] sm:$0xff]
    %v28 = vld [vmem:[%s2] sm:$0xff]
    %v29 = vld [vmem:[%s2 + $0x8] sm:$0xff]
    %v30 = vld [vmem:[%s2 + $0x10] sm:$0xff]
    %v31 = vld [vmem:[%s2 + $0x18] sm:$0xff]
    %33 = vset.pattern.permute.xlu0 0
    %34 = vperm.xlu0 %33, %v28
    %v35 = vpop.permute.xlu0 %34
    %38 = vset.pattern.permute.xlu0 0
    %39 = vperm.xlu0 %38, %v29
    %v40 = vpop.permute.xlu0 %39
    %43 = vset.pattern.permute.xlu0 0
    %44 = vperm.xlu0 %43, %v30
    %v45 = vpop.permute.xlu0 %44
    %48 = vset.pattern.permute.xlu0 0
    %49 = vperm.xlu0 %48, %v31
    %v50 = vpop.permute.xlu0 %49
    %vm52 = vcmask 523264
    %v54 = vsel %vm52, %v23, 0
    %v57 = vsel %vm52, %v24, 0
    %v60 = vsel %vm52, %v25, 0
    %v63 = vsel %vm52, %v26, 0
    %v66 = vsel %vm52, %v27, 0
    %68 = vmatprep.subr.mxu0 0.0
    %69 = vmatpush1.xpose.msra.mxu0 %v66
    %70 = vmatprep.subr.mxu0 0.0
    %71 = vmatpush1.xpose.msra.mxu0 0.0
    %72 = vmatprep.subr.mxu0 0.0
    %73 = vmatpush1.xpose.msra.mxu0 0.0
    %74 = vmatprep.subr.mxu0 0.0
    %75 = vmatpush1.xpose.msra.mxu0 0.0
    %76 = vmatprep.subr.mxu0 0.0
    %77 = vmatpush1.xpose.msra.mxu0 0.0
    %78 = vmatprep.subr.mxu0 0.0
    %79 = vmatpush1.xpose.msra.mxu0 0.0
    %80 = vmatprep.subr.mxu0 0.0
    %81 = vmatpush1.xpose.msra.mxu0 0.0
    %82 = vmatprep.subr.mxu0 0.0
    %83 = vmatpush1.xpose.msra.mxu0 0.0
    %84 = vmatprep.subr.mxu0 0.0
    %85 = vmatpush1.xpose.msra.mxu0 0.0
    %86 = vmatprep.subr.mxu0 0.0
    %87 = vmatpush1.xpose.msra.mxu0 0.0
    %88 = vmatprep.subr.mxu0 0.0
    %89 = vmatpush1.xpose.msra.mxu0 0.0
    %90 = vmatprep.subr.mxu0 0.0
    %91 = vmatpush1.xpose.msra.mxu0 0.0
    %92 = vmatprep.subr.mxu0 0.0
    %93 = vmatpush1.xpose.msra.mxu0 0.0
    %94 = vmatprep.subr.mxu0 0.0
    %95 = vmatpush1.xpose.msra.mxu0 0.0
    %96 = vmatprep.subr.mxu0 0.0
    %97 = vmatpush1.xpose.msra.mxu0 0.0
    %98 = vmatprep.subr.mxu0 0.0
    %99 = vmatpush1.xpose.msra.mxu0 0.0
    %100 = vmatprep.subr.mxu0 0.0
    %101 = vmatpush1.xpose.msra.mxu0 0.0
    %102 = vmatprep.subr.mxu0 0.0
    %103 = vmatpush1.xpose.msra.mxu0 0.0
    %104 = vmatprep.subr.mxu0 0.0
    %105 = vmatpush1.xpose.msra.mxu0 0.0
    %106 = vmatprep.subr.mxu0 0.0
    %107 = vmatpush1.xpose.msra.mxu0 0.0
    %108 = vmatprep.subr.mxu0 0.0
    %109 = vmatpush1.xpose.msra.mxu0 0.0
    %110 = vmatprep.subr.mxu0 0.0
    %111 = vmatpush1.xpose.msra.mxu0 0.0
    %112 = vmatprep.subr.mxu0 0.0
    %113 = vmatpush1.xpose.msra.mxu0 0.0
    %114 = vmatprep.subr.mxu0 0.0
    %115 = vmatpush1.xpose.msra.mxu0 0.0
    %116 = vmatprep.subr.mxu0 0.0
    %117 = vmatpush1.xpose.msra.mxu0 0.0
    %118 = vmatprep.subr.mxu0 0.0
    %119 = vmatpush1.xpose.msra.mxu0 0.0
    %120 = vmatprep.subr.mxu0 0.0
    %121 = vmatpush1.xpose.msra.mxu0 0.0
    %122 = vmatprep.subr.mxu0 0.0
    %123 = vmatpush1.xpose.msra.mxu0 0.0
    %124 = vmatprep.subr.mxu0 0.0
    %125 = vmatpush1.xpose.msra.mxu0 0.0
    %126 = vmatprep.subr.mxu0 0.0
    %127 = vmatpush1.xpose.msra.mxu0 0.0
    %128 = vmatprep.subr.mxu0 0.0
    %129 = vmatpush1.xpose.msra.mxu0 0.0
    %130 = vmatprep.subr.mxu0 0.0
    %131 = vmatpush1.xpose.msra.mxu0 0.0
    %132 = vmatprep.mubr.f32.mxu0 0.0
    %133 = vmatmul.mubr.f32.gmra.mrb[0].mxu0 %v54
    %v134 = vpop.f32.mrb[0].mxu0
    %v135 = vadd.f32 %v35, %v134
    %v136 = vpop.f32.mrb[0].mxu0
    %137 = vmatprep.mubr.f32.mxu0 0.0
    %138 = vmatmul.mubr.f32.gmra.mrb[0].mxu0 %v57
    %v139 = vpop.f32.mrb[0].mxu0
    %v140 = vadd.f32 %v40, %v139
    %v141 = vpop.f32.mrb[0].mxu0
    %142 = vmatprep.mubr.f32.mxu0 0.0
    %143 = vmatmul.mubr.f32.gmra.mrb[0].mxu0 %v60
    %v144 = vpop.f32.mrb[0].mxu0
    %v145 = vadd.f32 %v45, %v144
    %v146 = vpop.f32.mrb[0].mxu0
    %147 = vmatprep.mubr.f32.mxu0 0.0
    %148 = vmatmul.mubr.f32.gmra.mrb[0].mxu0 %v63
    %v149 = vpop.f32.mrb[0].mxu0
    %v150 = vadd.f32 %v50, %v149
    %v151 = vpop.f32.mrb[0].mxu0
    %152 = vdwg.mxu0
    %v153 = vmax.f32 %v135, 0.0
    %v154 = vmax.f32 %v140, 0.0
    %v155 = vmax.f32 %v145, 0.0
    %v156 = vmax.f32 %v150, 0.0
    %v157 = vld [vmem:[%s3] sm:$0xff]
    %v158 = vld [vmem:[%s3 + $0x8] sm:$0xff]
    %v159 = vld [vmem:[%s3 + $0x10] sm:$0xff]
    %v160 = vld [vmem:[%s3 + $0x18] sm:$0xff]
    %162 = vset.pattern.permute.xlu0 0
    %163 = vperm.xlu0 %162, %v157
    %v164 = vpop.permute.xlu0 %163
    %167 = vset.pattern.permute.xlu0 0
    %168 = vperm.xlu0 %167, %v158
    %v169 = vpop.permute.xlu0 %168
    %172 = vset.pattern.permute.xlu0 0
    %173 = vperm.xlu0 %172, %v159
    %v174 = vpop.permute.xlu0 %173
    %177 = vset.pattern.permute.xlu0 0
    %178 = vperm.xlu0 %177, %v160
    %v179 = vpop.permute.xlu0 %178
    %v181 = vmul.f32 %v153, %v164
    %v182 = vmul.f32 %v154, %v169
    %v183 = vmul.f32 %v155, %v174
    %v184 = vmul.f32 %v156, %v179
    %vm185 = vcmask 64512
    %v186 = vsel %vm185, %v181, 0.0
    %v187 = vsel %vm185, %v182, 0.0
    %v188 = vadd.f32 %v186, %v187
    %v189 = vsel %vm185, %v183, 0.0
    %v190 = vadd.f32 %v188, %v189
    %v191 = vsel %vm185, %v184, 0.0
    %v192 = vadd.f32 %v190, %v191
    %v193 = vrot.slane %v192, 4
    %v194 = vadd.f32 %v192, %v193
    %v195 = vrot.slane %v194, 2
    %v196 = vadd.f32 %v194, %v195
    %v197 = vrot.slane %v196, 1
    %v198 = vadd.f32 %v196, %v197
    %v199 = vld [vmem:[#allocation2] sm:$0x1]
    %201 = vset.pattern.permute.xlu0 0
    %202 = vperm.xlu0 %201, %v199
    %v203 = vpop.permute.xlu0 %202
    %v205 = vlaneseq
    %v206 = vshrl.u32 %v205, 7
    %v207 = vsub.s32 0, %v206
    %v208 = vrot.slane %v203, %v207
    %v209 = vadd.f32 %v198, %v208
    %v210 = vmul.f32 %v209, 0.5
    %v211 = vtanh.pop %v210
    %v212 = vmul.f32 %v211, 0.5
    %v213 = vadd.f32 %v212, 0.5
    %vm214 = vcmask 57344
    %215 = vst.msk [vmem:[#allocation3] sm:$0x1] %vm214, %v213
    // Predicated region
    $region22: #{tpu_custom_call.1} parent=1 // pred_check
      _
    $region23: #{tpu_custom_call.1} parent=1 // pred_check_branch
      %217 = sbr.rel (0) target = $region25
    $region24: #{tpu_custom_call.1} parent=1 // pred_region
      %s219 = ssub.s32 16, 16
      %220 = vsyncadd [#allocation4], %s219
      %s222 = sshll.u32 [#allocation3], 4
      %s223 = int_to_ptr.vmem [resolvable:$true] %s222
      %225 = dma.vmem_to_hbm [thread:$0]  %s223, 16, %s5, [#allocation4]
    $region25: #{tpu_custom_call.1} parent=1 // pred_fallthru
      _
    // Predicated region
    $region26: #{tpu_custom_call.1} parent=1 // pred_check
      _
    $region27: #{tpu_custom_call.1} parent=1 // pred_check_branch
      %227 = sbr.rel (0) target = $region29
    $region28: #{tpu_custom_call.1} parent=1 // pred_region
      %228 = dma.done [#allocation4], 16
    $region29: #{tpu_custom_call.1} parent=1 // pred_fallthru
      _
    %229 = vsyncpa [#allocation4], 1

</llo_original>
